<compile_context>
chip_gen: v7x
topology: tpu7x:2x2x1
jax: 0.10.0
libtpu: 0.0.40
codegen_flags: <defaults>
</compile_context>

<pallas_src>
import functools

import jax
import jax.numpy as jnp
from jax import lax
from jax.experimental import pallas as pl
from jax.experimental.pallas import tpu as pltpu


def _ls_ce_kernel(x_ref, tgt_ref, out_ref, *, smoothing, n_valid):
    confidence = 1.0 - smoothing

    x = x_ref[...].astype(jnp.float32)                     # (tile, C)
    tile, C = x.shape

    # logsumexp over the class (lane) axis -- one (tile, C) temporary.
    m = jnp.max(x, axis=-1, keepdims=True)                 # (tile, 1)
    lse = m + jnp.log(jnp.sum(jnp.exp(x - m), axis=-1, keepdims=True))  # (tile, 1)

    # Fused weighted lane reduction:
    #   loss = confidence*(lse - x[t]) + smoothing*(lse - mean(x))
    #        = lse - sum(w * x),  w = smoothing/C (+ confidence at target col)
    tgt = tgt_ref[...].astype(jnp.int32)                   # (tile, 1)
    col_ids = lax.broadcasted_iota(jnp.int32, (1, C), 1)   # (1, C), broadcasts vs tgt
    base_w = smoothing / C
    w = jnp.where(col_ids == tgt, confidence + base_w, base_w)          # (tile, C)
    wsum = jnp.sum(w * x, axis=-1, keepdims=True)                        # (tile, 1)

    loss = lse - wsum                                      # (tile, 1)

    # Mask rows past the true batch size (last block may be partial; its
    # out-of-bounds rows hold unspecified data -- the select discards them).
    row_ids = pl.program_id(0) * tile + lax.broadcasted_iota(jnp.int32, (tile, 1), 0)
    loss = jnp.where(row_ids < n_valid, loss, 0.0)

    # Per-block partial sum into SMEM; final /N happens in the wrapper.
    out_ref[0, 0] = jnp.sum(loss)


def _sublane_pack(itemsize):
    # 8 rows per vreg for 4-byte, 16 for 2-byte, 32 for 1-byte dtypes.
    return max(1, 4 // max(1, itemsize)) * 8


def _choose_tile(N, C, itemsize):
    # ~2 MiB of raw logits per block: already ~85% of HBM roofline, and with
    # double-buffering + f32 upcast + exp/w*x temporaries the live set stays
    # ~10-15 MiB -- safe on every generation (v7x: 64 MiB physical VMEM).
    budget_bytes = 2 * 1024 * 1024
    pack = _sublane_pack(itemsize)
    rows = budget_bytes // max(1, C * itemsize)
    rows = max(pack, min(int(rows), 1024))
    rows = (rows // pack) * pack
    n_rounded = ((N + pack - 1) // pack) * pack
    return max(pack, min(rows, n_rounded))


def label_smoothing_cross_entropy(x, target, smoothing=0.1, tile=None):
    """x: (N, C) float (f32 or bf16), target: (N,) int. Returns scalar f32 loss."""
    N, C = x.shape
    itemsize = jnp.dtype(x.dtype).itemsize
    pack = _sublane_pack(itemsize)
    if tile is None:
        tile = _choose_tile(N, C, itemsize)
    tile = max(pack, (int(tile) // pack) * pack)

    n_blocks = pl.cdiv(N, tile)
    tgt2d = target.astype(jnp.int32).reshape(N, 1)

    kernel = functools.partial(
        _ls_ce_kernel, smoothing=float(smoothing), n_valid=N
    )

    cost = pl.CostEstimate(
        flops=6 * N * C,
        transcendentals=N * C,
        bytes_accessed=N * C * itemsize + N * 4 + n_blocks * 4,
    )

    partials = pl.pallas_call(
        kernel,
        out_shape=jax.ShapeDtypeStruct((n_blocks, 1), jnp.float32),
        grid_spec=pltpu.PrefetchScalarGridSpec(
            num_scalar_prefetch=0,
            grid=(n_blocks,),
            in_specs=[
                pl.BlockSpec((tile, C), lambda i: (i, 0)),
                pl.BlockSpec((tile, 1), lambda i: (i, 0)),
            ],
            out_specs=pl.BlockSpec(
                (1, 1), lambda i: (i, 0), memory_space=pltpu.MemorySpace.SMEM
            ),
        ),
        compiler_params=pltpu.CompilerParams(
            dimension_semantics=("parallel",),   # independent blocks -> megacore on v7x
            vmem_limit_bytes=32 * 1024 * 1024,
        ),
        cost_estimate=cost,
    )(x, tgt2d)

    return jnp.sum(partials) / jnp.float32(N)


def _reference(x, target, smoothing=0.1):
    logprobs = jax.nn.log_softmax(x.astype(jnp.float32), axis=-1)
    nll = -jnp.take_along_axis(logprobs, target[:, None], axis=-1)[:, 0]
    smooth = -jnp.mean(logprobs, axis=-1)
    loss = (1.0 - smoothing) * nll + smoothing * smooth
    return jnp.mean(loss)


if __name__ == "__main__":
    key = jax.random.PRNGKey(0)
    kx, kt, kx2, kt2, kx3, kt3 = jax.random.split(key, 6)
    smoothing = 0.1

    # Case 1: small aligned shapes (batch=16, classes=32), f32 logits.
    N, C = 16, 32
    x = jax.random.normal(kx, (N, C), dtype=jnp.float32)
    target = jax.random.randint(kt, (N,), 0, C, dtype=jnp.int32)
    loss = jax.block_until_ready(
        label_smoothing_cross_entropy(x, target, smoothing=smoothing)
    )
    ref = _reference(x, target, smoothing=smoothing)
    assert jnp.allclose(loss, ref, atol=1e-5, rtol=1e-5), (loss, ref)

    # Case 2: batch not a multiple of 8 -> partial last block + in-kernel mask,
    # no wrapper-side padding of the logits.
    N2, C2 = 13, 40
    x2 = jax.random.normal(kx2, (N2, C2), dtype=jnp.float32)
    target2 = jax.random.randint(kt2, (N2,), 0, C2, dtype=jnp.int32)
    loss2 = jax.block_until_ready(
        label_smoothing_cross_entropy(x2, target2, smoothing=smoothing)
    )
    ref2 = _reference(x2, target2, smoothing=smoothing)
    assert jnp.allclose(loss2, ref2, atol=1e-5, rtol=1e-5), (loss2, ref2)

    # Case 3: bf16 logits, forced small tile -> multiple grid blocks, exercises
    # the SMEM per-block partial-sum output and the 16-row bf16 alignment.
    N3, C3 = 24, 48
    x3 = jax.random.normal(kx3, (N3, C3), dtype=jnp.float32).astype(jnp.bfloat16)
    target3 = jax.random.randint(kt3, (N3,), 0, C3, dtype=jnp.int32)
    loss3 = jax.block_until_ready(
        label_smoothing_cross_entropy(x3, target3, smoothing=smoothing, tile=16)
    )
    ref3 = _reference(x3, target3, smoothing=smoothing)
    assert jnp.allclose(loss3, ref3, atol=1e-4, rtol=1e-4), (loss3, ref3)

    print("KERNEL_OK")
</pallas_src>

<mosaic_0001>
module attributes {stable_mosaic.version = 11 : i64} {
  func.func @_ls_ce_kernel(%arg0: i32, %arg1: memref<16x32xf32, #tpu.memory_space<vmem>>, %arg2: memref<16x1xi32, #tpu.memory_space<vmem>>, %arg3: memref<1x1xf32, #tpu.memory_space<smem>>) attributes {dimension_semantics = [#tpu.dimension_semantics<parallel>], iteration_bounds = array<i64: 1>, scalar_prefetch = 0 : i64, scratch_operands = 0 : i64, tpu.core_type = #tpu.core_type<tc>, window_params = [{transform_indices = @transform_0, window_bounds = array<i64: 16, 32>}, {transform_indices = @transform_1, window_bounds = array<i64: 16, 1>}, {transform_indices = @transform_2, window_bounds = array<i64: 1, 1>}]} {
    %c0 = arith.constant 0 : index
    %c0_0 = arith.constant 0 : index
    %0 = vector.load %arg1[%c0, %c0_0] : memref<16x32xf32, #tpu.memory_space<vmem>>, vector<16x32xf32>
    %cst = arith.constant dense<0xFF800000> : vector<16xf32>
    %1 = vector.multi_reduction <maximumf>, %0, %cst [1] : vector<16x32xf32> to vector<16xf32>
    %2 = vector.shape_cast %1 : vector<16xf32> to vector<16x1xf32>
    %3 = vector.broadcast %2 : vector<16x1xf32> to vector<16x32xf32>
    %4 = arith.subf %0, %3 : vector<16x32xf32>
    %5 = math.exp %4 : vector<16x32xf32>
    %cst_1 = arith.constant dense<0.000000e+00> : vector<16xf32>
    %6 = vector.multi_reduction <add>, %5, %cst_1 [1] : vector<16x32xf32> to vector<16xf32>
    %7 = vector.shape_cast %6 : vector<16xf32> to vector<16x1xf32>
    %8 = math.log %7 : vector<16x1xf32>
    %9 = arith.addf %2, %8 : vector<16x1xf32>
    %c0_2 = arith.constant 0 : index
    %c0_3 = arith.constant 0 : index
    %10 = vector.load %arg2[%c0_2, %c0_3] : memref<16x1xi32, #tpu.memory_space<vmem>>, vector<16x1xi32>
    %11 = tpu.iota {dimensions = array<i32: 1>} : vector<1x32xi32>
    %12 = vector.broadcast %11 : vector<1x32xi32> to vector<16x32xi32>
    %13 = vector.broadcast %10 : vector<16x1xi32> to vector<16x32xi32>
    %14 = arith.cmpi eq, %12, %13 : vector<16x32xi32>
    %cst_4 = arith.constant 0.903124988 : f32
    %cst_5 = arith.constant 3.125000e-03 : f32
    %15 = vector.broadcast %cst_4 : f32 to vector<16x32xf32>
    %16 = vector.broadcast %cst_5 : f32 to vector<16x32xf32>
    %17 = arith.select %14, %15, %16 : vector<16x32xi1>, vector<16x32xf32>
    %18 = arith.mulf %17, %0 : vector<16x32xf32>
    %cst_6 = arith.constant dense<0.000000e+00> : vector<16xf32>
    %19 = vector.multi_reduction <add>, %18, %cst_6 [1] : vector<16x32xf32> to vector<16xf32>
    %20 = vector.shape_cast %19 : vector<16xf32> to vector<16x1xf32>
    %21 = arith.subf %9, %20 : vector<16x1xf32>
    %c16_i32 = arith.constant 16 : i32
    %22 = arith.muli %arg0, %c16_i32 : i32
    %23 = tpu.iota {dimensions = array<i32: 0>} : vector<16x1xi32>
    %24 = vector.broadcast %22 : i32 to vector<16x1xi32>
    %25 = arith.addi %24, %23 : vector<16x1xi32>
    %c16_i32_7 = arith.constant 16 : i32
    %26 = vector.broadcast %c16_i32_7 : i32 to vector<16x1xi32>
    %27 = arith.cmpi slt, %25, %26 : vector<16x1xi32>
    %cst_8 = arith.constant 0.000000e+00 : f32
    %28 = vector.broadcast %cst_8 : f32 to vector<16x1xf32>
    %29 = arith.select %27, %21, %28 : vector<16x1xi1>, vector<16x1xf32>
    %30 = vector.shape_cast %29 : vector<16x1xf32> to vector<1x16x1xf32>
    %cst_9 = arith.constant dense<0.000000e+00> : vector<1xf32>
    %31 = vector.multi_reduction <add>, %30, %cst_9 [1, 2] : vector<1x16x1xf32> to vector<1xf32>
    %32 = vector.shape_cast %31 : vector<1xf32> to vector<1x1x1xf32>
    %33 = vector.extract %32[0, 0, 0] : f32 from vector<1x1x1xf32>
    %c0_10 = arith.constant 0 : index
    %c0_11 = arith.constant 0 : index
    %34 = memref.load %arg3[%c0_10, %c0_11] : memref<1x1xf32, #tpu.memory_space<smem>>
    memref.store %33, %arg3[%c0_10, %c0_11] : memref<1x1xf32, #tpu.memory_space<smem>>
    return
  }
  func.func @transform_0(%arg0: i32) -> (i32, i32) {
    %c0_i32 = arith.constant 0 : i32
    %c0_i32_0 = arith.constant 0 : i32
    return %arg0, %c0_i32 : i32, i32
  }
  func.func @transform_1(%arg0: i32) -> (i32, i32) {
    %c0_i32 = arith.constant 0 : i32
    %c0_i32_0 = arith.constant 0 : i32
    return %arg0, %c0_i32 : i32, i32
  }
  func.func @transform_2(%arg0: i32) -> (i32, i32) {
    %c0_i32 = arith.constant 0 : i32
    %c0_i32_0 = arith.constant 0 : i32
    return %arg0, %c0_i32 : i32, i32
  }
}

</mosaic_0001>

<llo_original>
// kernel: tpu_custom_call.1
$region0: #{tpu_custom_call.1}
  #allocation0 [shape = 'u32[]', space=smem, size = 0x4, offset = 0x4, fixed_abs, tag = 'smem constant byte address 0x4 - core index']
  #allocation1 [shape = 'u32[144,128]{1,0:T(1,128)}', space=vmem, size = 0x12000, scoped, tag = 'internal scratch']
  %s0 = inlined_call_operand.vmem [shape: f32[16,32], index: 0, kind: input, shape index: {}]
  %s1 = inlined_call_operand.vmem [shape: s32[16,1], index: 1, kind: input, shape index: {}]
  %s2 = inlined_call_operand.hbm [shape: f32[1,1], index: 2, kind: output, shape index: {}]
  %s3 = sld [smem:[#allocation0]]
  $region18: #{tpu_custom_call.1} parent=0
    _
  %s5 = ssub.s32 1, %s3
  %s6 = scalar_select 0, %s5, %s3
  $region1: #{tpu_custom_call.1} parent=0
    #allocation2 [shape = 'u8[512]{0}', space=smem, size = 0x200, scoped, tag = 'output window, operand 0, single buffered']
    #allocation3 [shape = 's32[1]{0}', space=sflag, size = 0x4, scoped, tag = 'scoped memory for tpu_custom_call.1']
    %7 = vsyncpa [#allocation3], 0
    // Predicated region
    $region2: #{tpu_custom_call.1} parent=1 // pred_check
      _
    $region3: #{tpu_custom_call.1} parent=1 // pred_check_branch
      %9 = sbr.rel (0) target = $region5
    $region4: #{tpu_custom_call.1} parent=1 // pred_region
      _
    $region5: #{tpu_custom_call.1} parent=1 // pred_fallthru
      _
    // Predicated region
    $region6: #{tpu_custom_call.1} parent=1 // pred_check
      _
    $region7: #{tpu_custom_call.1} parent=1 // pred_check_branch
      %11 = sbr.rel (0) target = $region9
    $region8: #{tpu_custom_call.1} parent=1 // pred_region
      _
    $region9: #{tpu_custom_call.1} parent=1 // pred_fallthru
      _
    %v12 = vld [vmem:[%s0] sm:$0xff]
    %v13 = vld [vmem:[%s0 + $0x8] sm:$0xff]
    %vm14 = vcmask 261120
    %v15 = vsel %vm14, %v12, -inf
    %16 = vmax.xlane.f32.xlu0 %v15
    %v17 = vpop.xlane.xlu0 %16
    %v18 = vsel %vm14, %v13, -inf
    %19 = vmax.xlane.f32.xlu0 %v18
    %v20 = vpop.xlane.xlu0 %19
    %v21 = vsub.f32 %v12, %v17
    %v22 = vsub.f32 %v13, %v20
    %v23 = vmul.f32 %v21, 1.442695
    %v24 = vpow.pop %v23
    %v25 = vmul.f32 %v22, 1.442695
    %v26 = vpow.pop %v25
    %v27 = vsel %vm14, %v24, 0.0
    %28 = vadd.xlane.f32.xlu0 %v27
    %v29 = vpop.xlane.xlu0 %28
    %v30 = vsel %vm14, %v26, 0.0
    %31 = vadd.xlane.f32.xlu0 %v30
    %v32 = vpop.xlane.xlu0 %31
    %v33 = vlog2.pop %v29
    %v34 = vmul.f32 %v33, 0.6931472
    %v35 = vlog2.pop %v32
    %v36 = vmul.f32 %v35, 0.6931472
    %v37 = vadd.f32 %v17, %v34
    %v38 = vadd.f32 %v20, %v36
    %v39 = vld [vmem:[%s1] sm:$0xff]
    %v40 = vld [vmem:[%s1 + $0x8] sm:$0xff]
    %v41 = vlaneseq
    %v42 = vand.u32 %v41, 127
    %43 = vset.pattern.permute.xlu0 0
    %44 = vperm.xlu0 %43, %v39
    %v45 = vpop.permute.xlu0 %44
    %46 = vset.pattern.permute.xlu0 0
    %47 = vperm.xlu0 %46, %v40
    %v48 = vpop.permute.xlu0 %47
    %vm49 = vcmp.eq.s32.totalorder %v42, %v45
    %vm50 = vcmp.eq.s32.totalorder %v42, %v48
    %v51 = vsel %vm49, 0.903125, 0.003125
    %v52 = vsel %vm50, 0.903125, 0.003125
    %v53 = vmul.f32 %v51, %v12
    %v54 = vmul.f32 %v52, %v13
    %v55 = vsel %vm14, %v53, 0.0
    %56 = vadd.xlane.f32.xlu0 %v55
    %v57 = vpop.xlane.xlu0 %56
    %v58 = vsel %vm14, %v54, 0.0
    %59 = vadd.xlane.f32.xlu0 %v58
    %v60 = vpop.xlane.xlu0 %59
    %v61 = vsub.f32 %v37, %v57
    %v62 = vsub.f32 %v38, %v60
    %s63 = smul.u32 0, 16
    %v64 = vlaneseq
    %v65 = vshrl.u32 %v64, 7
    %v66 = vadd.s32 %v65, 8
    %v67 = vstv %s63
    %v68 = vadd.s32 %v67, %v65
    %v69 = vadd.s32 %v67, %v66
    %vm70 = vcmp.lt.s32.totalorder %v68, 16
    %vm71 = vcmp.lt.s32.totalorder %v69, 16
    %v72 = vsel %vm70, %v61, 0.0
    %v73 = vsel %vm71, %v62, 0.0
    %vm74 = vcmask 7168
    %v75 = vsel %vm74, %v72, 0.0
    %v76 = vsel %vm74, %v73, 0.0
    %v77 = vadd.f32 %v75, %v76
    %78 = vadd.xlane.f32.xlu0 %v77
    %v79 = vpop.xlane.xlu0 %78
    %v80 = vrot.slane %v79, 4
    %v81 = vadd.f32 %v79, %v80
    %v82 = vrot.slane %v81, 2
    %v83 = vadd.f32 %v81, %v82
    %v84 = vrot.slane %v83, 1
    %v85 = vadd.f32 %v83, %v84
    %s86 = vtos %v85
    %s87 = scalar_lea.smem [#allocation2], 0
    %88 = sst [smem:[%s87]] %s86
    // Predicated region
    $region10: #{tpu_custom_call.1} parent=1 // pred_check
      _
    $region11: #{tpu_custom_call.1} parent=1 // pred_check_branch
      %90 = sbr.rel (0) target = $region13
    $region12: #{tpu_custom_call.1} parent=1 // pred_region
      %s92 = ssub.s32 16, 16
      %93 = vsyncadd [#allocation3], %s92
      %96 = dma.smem_to_hbm [#allocation2], 16, %s2, [#allocation3]
    $region13: #{tpu_custom_call.1} parent=1 // pred_fallthru
      _
    // Predicated region
    $region14: #{tpu_custom_call.1} parent=1 // pred_check
      _
    $region15: #{tpu_custom_call.1} parent=1 // pred_check_branch
      %98 = sbr.rel (0) target = $region17
    $region16: #{tpu_custom_call.1} parent=1 // pred_region
      %99 = dma.done [#allocation3], 16
    $region17: #{tpu_custom_call.1} parent=1 // pred_fallthru
      _
    %100 = sfence
    %101 = vsyncpa [#allocation3], 1

</llo_original>
